<compile_context>
chip_gen: v6e
topology: v6e:2x2x1
jax: 0.10.0
libtpu: 0.0.40
codegen_flags: <defaults>
</compile_context>

<pallas_src>
import functools

import jax
import jax.numpy as jnp
from jax.experimental import pallas as pl
from jax.experimental.pallas import tpu as pltpu


def _round_up(v, m):
    return ((v + m - 1) // m) * m


def _round_down(v, m):
    return max(m, (v // m) * m)


def _sublane_multiple(dtype):
    # Rows per vreg sublane group: f32 -> 8, bf16 -> 16, int8/fp8 -> 32.
    return 32 // jnp.dtype(dtype).itemsize


def _vmem_capacity_bytes():
    try:
        info = pltpu.get_tpu_info()
        cap = getattr(info, "vmem_capacity_bytes", None)
        if cap:
            return int(cap)
    except Exception:
        pass
    return 64 * 1024 * 1024  # conservative fallback (v7x per-TensorCore VMEM)


def _symbol_extractor_kernel(threshold, x_ref, w_ref, b_ref, out_ref):
    # x: [tm, E], w: [E, N], b: [1, N] -> out: [tm, 3N] = [logits | probs | symbols]
    logits = jnp.dot(x_ref[...], w_ref[...],
                     preferred_element_type=jnp.float32)          # [tm, N] f32
    logits = logits + b_ref[...].astype(jnp.float32)
    probs = jax.nn.sigmoid(logits)
    # Threshold in f32 BEFORE any downcast so symbol values stay exact even if
    # the fused slab is written in a narrower dtype (0.0/1.0 are exact).
    symbols = (probs > threshold).astype(jnp.float32)
    fused = jnp.concatenate([logits, probs, symbols], axis=-1)    # [tm, 3N] f32
    out_ref[...] = fused.astype(out_ref.dtype)                    # single store


def symbol_extractor(x, weight, bias, threshold=0.5, *,
                     weight_is_transposed=False,
                     symbols_dtype=jnp.float32,
                     tm=None,
                     target_step_bytes=2 * 1024 * 1024,
                     min_grid_steps=2,
                     vmem_budget_bytes=None,
                     vmem_limit_bytes=None):
    """
    x:      [..., E]  activations (native dtype, bf16 or f32)
    weight: [N, E]    PyTorch Linear layout (or [E, N] if weight_is_transposed)
    bias:   [N]
    Returns dict with 'logits', 'probs', 'symbols', each shaped [..., N].
    """
    E = x.shape[-1]
    if weight_is_transposed:
        w_t = weight                          # already [E, N]
        N = weight.shape[-1]
    else:
        N = weight.shape[0]
        # One-time layout plumbing; under jit with a constant weight this folds.
        # For hot loops, pre-transpose once and pass weight_is_transposed=True.
        w_t = jnp.transpose(weight)           # [E, N]
    lead_shape = x.shape[:-1]

    x2 = x.reshape(-1, E)                     # native dtype, no forced f32 cast
    M = x2.shape[0]
    b2 = bias.reshape(1, N)

    out_dtype = x2.dtype                      # fused slab dtype (logits/probs/symbols)
    W = 3 * N                                 # fused output width

    # ---- generation-aware VMEM budget (v5e/v6e: 128 MiB, v7x: 64 MiB) ----
    cap = _vmem_capacity_bytes()
    if vmem_budget_bytes is None:
        vmem_budget_bytes = int(cap * 0.6)
    if vmem_limit_bytes is None:
        vmem_limit_bytes = int(cap * 0.75)

    xb = jnp.dtype(x2.dtype).itemsize
    wb = jnp.dtype(w_t.dtype).itemsize
    bb = jnp.dtype(b2.dtype).itemsize
    ob = jnp.dtype(out_dtype).itemsize

    sublane = max(_sublane_multiple(x2.dtype), _sublane_multiple(out_dtype))
    sub_w = _sublane_multiple(w_t.dtype)
    sub_b = _sublane_multiple(b2.dtype)

    # Lane-padded, double-buffered VMEM accounting (conservative: weight/bias
    # counted with 2 buffers even though their index_map is constant).
    resident = (2 * _round_up(E, sub_w) * _round_up(N, 128) * wb
                + 2 * sub_b * _round_up(N, 128) * bb)
    per_row_vmem = 2 * (_round_up(E, 128) * xb + _round_up(W, 128) * ob)
    per_row_hbm = E * xb + W * ob             # actual HBM traffic per row

    if tm is None:
        headroom = vmem_budget_bytes - resident
        if headroom < sublane * per_row_vmem:
            # TODO(synk): for very large [E, N] weights add an N-tiling grid
            # axis instead of shrinking tm; here we just make room for a
            # minimal tile and surface it via a larger vmem limit.
            headroom = sublane * per_row_vmem
            vmem_limit_bytes = max(vmem_limit_bytes, resident + 2 * headroom)
        tm_vmem = headroom // per_row_vmem
        tm_bw = -(-target_step_bytes // per_row_hbm)   # amortize ~0.35us/step
        tm = min(tm_vmem, max(tm_bw, sublane))
        # Keep >= min_grid_steps steps for pipelining / megacore sharding.
        tm = min(tm, -(-M // max(min_grid_steps, 1)))

    if tm >= M:
        tm = M                                 # full-extent block (always legal)
    else:
        tm = _round_down(min(tm, M), sublane)  # sublane-aligned partial blocks
        if tm >= M:
            tm = M

    grid = (pl.cdiv(M, tm),)

    fused = pl.pallas_call(
        functools.partial(_symbol_extractor_kernel, float(threshold)),
        out_shape=jax.ShapeDtypeStruct((M, W), out_dtype),
        grid_spec=pltpu.PrefetchScalarGridSpec(
            num_scalar_prefetch=0,
            grid=grid,
            in_specs=[
                pl.BlockSpec((tm, E), lambda i: (i, 0)),   # streamed x tile
                pl.BlockSpec((E, N), lambda i: (0, 0)),    # weight: VMEM-resident
                pl.BlockSpec((1, N), lambda i: (0, 0)),    # bias: VMEM-resident
            ],
            out_specs=pl.BlockSpec((tm, W), lambda i: (i, 0)),
        ),
        compiler_params=pltpu.CompilerParams(
            dimension_semantics=("parallel",),
            vmem_limit_bytes=int(vmem_limit_bytes),
        ),
    )(x2, w_t, b2)

    fused = fused.reshape(*lead_shape, W)
    logits = fused[..., 0:N]
    probs = fused[..., N:2 * N]
    symbols = fused[..., 2 * N:3 * N].astype(symbols_dtype)   # torch .float() parity
    return {'logits': logits, 'probs': probs, 'symbols': symbols}


if __name__ == "__main__":
    # Small shapes implied by the forward: x is [batch, seq, embed_dim].
    batch, seq, embed_dim, num_symbols = 2, 8, 32, 16
    threshold = 0.5

    key = jax.random.PRNGKey(0)
    kx, kw, kb = jax.random.split(key, 3)

    x = jax.random.normal(kx, (batch, seq, embed_dim), dtype=jnp.float32)

    # Deterministic init mimicking nn.Linear defaults (uniform +-1/sqrt(fan_in)).
    bound = 1.0 / (embed_dim ** 0.5)
    weight = jax.random.uniform(kw, (num_symbols, embed_dim),
                                minval=-bound, maxval=bound, dtype=jnp.float32)
    bias = jax.random.uniform(kb, (num_symbols,),
                              minval=-bound, maxval=bound, dtype=jnp.float32)

    out = symbol_extractor(x, weight, bias, threshold)
    jax.block_until_ready(out)

    # Reference check in plain JAX.
    ref_logits = x @ weight.T + bias
    ref_probs = jax.nn.sigmoid(ref_logits)
    ref_symbols = (ref_probs > threshold).astype(jnp.float32)
    assert out['logits'].shape == (batch, seq, num_symbols)
    assert jnp.allclose(out['logits'], ref_logits, atol=1e-5, rtol=1e-5)
    assert jnp.allclose(out['probs'], ref_probs, atol=1e-5, rtol=1e-5)
    assert jnp.array_equal(out['symbols'], ref_symbols)

    print("KERNEL_OK")
</pallas_src>

<mosaic_0001>
module attributes {stable_mosaic.version = 11 : i64} {
  func.func @_symbol_extractor_kernel(%arg0: i32, %arg1: memref<8x32xf32, #tpu.memory_space<vmem>>, %arg2: memref<32x16xf32, #tpu.memory_space<vmem>>, %arg3: memref<1x16xf32, #tpu.memory_space<vmem>>, %arg4: memref<8x48xf32, #tpu.memory_space<vmem>>) attributes {dimension_semantics = [#tpu.dimension_semantics<parallel>], iteration_bounds = array<i64: 2>, scalar_prefetch = 0 : i64, scratch_operands = 0 : i64, tpu.core_type = #tpu.core_type<tc>, window_params = [{transform_indices = @transform_0, window_bounds = array<i64: 8, 32>}, {pipeline_mode = #tpu.pipeline_mode<synchronous>, transform_indices = @transform_1, window_bounds = array<i64: 32, 16>}, {pipeline_mode = #tpu.pipeline_mode<synchronous>, transform_indices = @transform_2, window_bounds = array<i64: 1, 16>}, {transform_indices = @transform_3, window_bounds = array<i64: 8, 48>}]} {
    %c0 = arith.constant 0 : index
    %c0_0 = arith.constant 0 : index
    %0 = vector.load %arg1[%c0, %c0_0] : memref<8x32xf32, #tpu.memory_space<vmem>>, vector<8x32xf32>
    %c0_1 = arith.constant 0 : index
    %c0_2 = arith.constant 0 : index
    %1 = vector.load %arg2[%c0_1, %c0_2] : memref<32x16xf32, #tpu.memory_space<vmem>>, vector<32x16xf32>
    %cst = arith.constant dense<0.000000e+00> : vector<8x16xf32>
    %2 = tpu.matmul %0, %1, %cst {dimension_numbers = #tpu.dot_dimension_numbers<[1], [0], [0], [1], [0, 0, 1, 1], [], []>} : vector<8x32xf32>, vector<32x16xf32>, vector<8x16xf32> -> vector<8x16xf32>
    %c0_3 = arith.constant 0 : index
    %c0_4 = arith.constant 0 : index
    %3 = vector.load %arg3[%c0_3, %c0_4] : memref<1x16xf32, #tpu.memory_space<vmem>>, vector<1x16xf32>
    %4 = vector.broadcast %3 : vector<1x16xf32> to vector<8x16xf32>
    %5 = arith.addf %2, %4 : vector<8x16xf32>
    %6 = arith.negf %5 : vector<8x16xf32>
    %7 = math.exp %6 : vector<8x16xf32>
    %cst_5 = arith.constant 1.000000e+00 : f32
    %8 = vector.broadcast %cst_5 : f32 to vector<8x16xf32>
    %9 = arith.addf %8, %7 : vector<8x16xf32>
    %10 = arith.divf %8, %9 : vector<8x16xf32>
    %cst_6 = arith.constant 5.000000e-01 : f32
    %11 = vector.broadcast %cst_6 : f32 to vector<8x16xf32>
    %12 = arith.cmpf ogt, %10, %11 : vector<8x16xf32>
    %13 = arith.extui %12 : vector<8x16xi1> to vector<8x16xi32>
    %14 = arith.sitofp %13 : vector<8x16xi32> to vector<8x16xf32>
    %15 = tpu.concatenate %5, %10, %14 in 1 : vector<8x16xf32>, vector<8x16xf32>, vector<8x16xf32> -> vector<8x48xf32>
    %c0_7 = arith.constant 0 : index
    %c0_8 = arith.constant 0 : index
    %16 = vector.load %arg4[%c0_7, %c0_8] : memref<8x48xf32, #tpu.memory_space<vmem>>, vector<8x48xf32>
    tpu.vector_store %arg4[%c0_7, %c0_8], %15 {strides = array<i32>} : memref<8x48xf32, #tpu.memory_space<vmem>>, vector<8x48xf32>,
    return
  }
  func.func @transform_0(%arg0: i32) -> (i32, i32) {
    %c0_i32 = arith.constant 0 : i32
    %c0_i32_0 = arith.constant 0 : i32
    return %arg0, %c0_i32 : i32, i32
  }
  func.func @transform_1(%arg0: i32) -> (i32, i32) {
    %c0_i32 = arith.constant 0 : i32
    %c0_i32_0 = arith.constant 0 : i32
    %c0_i32_1 = arith.constant 0 : i32
    return %c0_i32, %c0_i32_0 : i32, i32
  }
  func.func @transform_2(%arg0: i32) -> (i32, i32) {
    %c0_i32 = arith.constant 0 : i32
    %c0_i32_0 = arith.constant 0 : i32
    %c0_i32_1 = arith.constant 0 : i32
    return %c0_i32, %c0_i32_0 : i32, i32
  }
  func.func @transform_3(%arg0: i32) -> (i32, i32) {
    %c0_i32 = arith.constant 0 : i32
    %c0_i32_0 = arith.constant 0 : i32
    return %arg0, %c0_i32 : i32, i32
  }
}

</mosaic_0001>

<llo_original>
// kernel: tpu_custom_call.1
$region0: #{tpu_custom_call.1}
  #allocation0 [shape = 'u32[]', space=smem, size = 0x4, offset = 0x4, fixed_abs, tag = 'smem constant byte address 0x4 - core index']
  #allocation1 [shape = 'u32[144,128]{1,0:T(1,128)}', space=vmem, size = 0x12000, scoped, tag = 'internal scratch']
  %s0 = inlined_call_operand.vmem [shape: f32[16,32], index: 0, kind: input, shape index: {}]
  %s1 = inlined_call_operand.vmem [shape: f32[32,16], index: 1, kind: input, shape index: {}]
  %s2 = inlined_call_operand.vmem [shape: f32[1,16], index: 2, kind: input, shape index: {}]
  %s3 = inlined_call_operand.hbm [shape: f32[16,48], index: 3, kind: output, shape index: {}]
  %s4 = sld [smem:[#allocation0]]
  $region45: #{tpu_custom_call.1} parent=0
    _
  %s6 = ssub.s32 1, %s4
  %s7 = scalar_select 0, %s6, %s4
  $region1: #{tpu_custom_call.1} parent=0
    #allocation2 [shape = 'u8[8192]{0}', space=vmem, size = 0x2000, scoped, tag = 'output window, operand 0']
    #allocation3 [shape = 's32[2]{0}', space=sflag, size = 0x8, scoped, tag = 'scoped memory for tpu_custom_call.1']
    %8 = vsyncpa [#allocation3], 0
    %s9 = scalar_lea.sflag [#allocation3], 1
    %10 = vsyncpa %s9, 0
    loop: start=0, step=1, limit=4
    $region2: #{tpu_custom_call.1} parent=1 // loop_pre_header
      _
    $region3: #{tpu_custom_call.1} parent=1 // loop_header
      %s12 = sphi 0, %s16
      %p13 = scmp.ge.s32.totalorder %s12, 4
      %s22 = sphi 0, %s24
      %s25 = sphi 0, %s22
      %s26 = sphi 0, %s25
      %s42 = sphi 0, %s26
      %s46 = sphi 0, %s46
      %s48 = sphi 0, %s46
      %s49 = sphi 0, %s48
      %s63 = sphi 0, %s49
      %s67 = sphi 0, %s67
      %s69 = sphi 0, %s67
      %s70 = sphi 0, %s69
      %s84 = sphi 0, %s70
      %s90 = sphi 0, %s92
      %s93 = sphi 0, %s90
      %s94 = sphi 0, %s93
      %s110 = sphi 0, %s94
    $region4: #{tpu_custom_call.1} parent=1 // loop_header_branch
      %15 = sbr.rel (%p13) target = $region8
    $region5: #{tpu_custom_call.1} parent=1 // loop_body
      %s17 = ssub.s32 %s12, 1
      %s18 = ssub.s32 %s12, 2
      %s19 = sadd.s32 %s12, 1
      %s20 = ssub.s32 %s12, %s19
      %p21 = scmp.eq.s32.totalorder %s20, 0
      %s23 = sadd.s32 %s22, 1
      %s24 = scalar_select %p21, %s22, %s23
      %p27 = pneg %p21
      %p28 = scmp.eq.s32.totalorder %s12, 1
      %p29 = por %p27, %p28
      %p30 = scmp.ne.s32.totalorder %s22, %s25
      %p31 = scmp.eq.s32.totalorder %s12, 0
      %p32 = por %p30, %p31
      %p33 = scmp.ne.s32.totalorder %s22, %s25
      %p34 = scmp.eq.s32.totalorder %s17, 1
      %p35 = por %p33, %p34
      %p36 = scmp.ne.s32.totalorder %s25, %s26
      %p37 = scmp.eq.s32.totalorder %s17, 0
      %p38 = por %p36, %p37
      %p39 = scmp.ne.s32.totalorder %s25, %s26
      %p40 = scmp.eq.s32.totalorder %s18, 1
      %p41 = por %p39, %p40
      %p43 = scmp.ne.s32.totalorder %s26, %s42
      %p44 = scmp.eq.s32.totalorder %s18, 0
      %p45 = por %p43, %p44
      %s47 = sadd.s32 %s46, 1
      %p50 = scmp.eq.s32.totalorder %s12, 1
      %p51 = scmp.ne.s32.totalorder %s46, %s48
      %p52 = scmp.eq.s32.totalorder %s12, 0
      %p53 = por %p51, %p52
      %p54 = scmp.ne.s32.totalorder %s46, %s48
      %p55 = scmp.eq.s32.totalorder %s17, 1
      %p56 = por %p54, %p55
      %p57 = scmp.ne.s32.totalorder %s48, %s49
      %p58 = scmp.eq.s32.totalorder %s17, 0
      %p59 = por %p57, %p58
      %p60 = scmp.ne.s32.totalorder %s48, %s49
      %p61 = scmp.eq.s32.totalorder %s18, 1
      %p62 = por %p60, %p61
      %p64 = scmp.ne.s32.totalorder %s49, %s63
      %p65 = scmp.eq.s32.totalorder %s18, 0
      %p66 = por %p64, %p65
      %s68 = sadd.s32 %s67, 1
      %p71 = scmp.eq.s32.totalorder %s12, 1
      %p72 = scmp.ne.s32.totalorder %s67, %s69
      %p73 = scmp.eq.s32.totalorder %s12, 0
      %p74 = por %p72, %p73
      %p75 = scmp.ne.s32.totalorder %s67, %s69
      %p76 = scmp.eq.s32.totalorder %s17, 1
      %p77 = por %p75, %p76
      %p78 = scmp.ne.s32.totalorder %s69, %s70
      %p79 = scmp.eq.s32.totalorder %s17, 0
      %p80 = por %p78, %p79
      %p81 = scmp.ne.s32.totalorder %s69, %s70
      %p82 = scmp.eq.s32.totalorder %s18, 1
      %p83 = por %p81, %p82
      %p85 = scmp.ne.s32.totalorder %s70, %s84
      %p86 = scmp.eq.s32.totalorder %s18, 0
      %p87 = por %p85, %p86
      %s88 = ssub.s32 %s12, %s19
      %p89 = scmp.eq.s32.totalorder %s88, 0
      %s91 = sadd.s32 %s90, 1
      %s92 = scalar_select %p89, %s90, %s91
      %p95 = pneg %p89
      %p96 = scmp.eq.s32.totalorder %s12, 1
      %p97 = por %p95, %p96
      %p98 = scmp.ne.s32.totalorder %s90, %s93
      %p99 = scmp.eq.s32.totalorder %s12, 0
      %p100 = por %p98, %p99
      %p101 = scmp.ne.s32.totalorder %s90, %s93
      %p102 = scmp.eq.s32.totalorder %s17, 1
      %p103 = por %p101, %p102
      %p104 = scmp.ne.s32.totalorder %s93, %s94
      %p105 = scmp.eq.s32.totalorder %s17, 0
      %p106 = por %p104, %p105
      %p107 = scmp.ne.s32.totalorder %s93, %s94
      %p108 = scmp.eq.s32.totalorder %s18, 1
      %p109 = por %p107, %p108
      %p111 = scmp.ne.s32.totalorder %s94, %s110
      %p112 = scmp.eq.s32.totalorder %s18, 0
      %p113 = por %p111, %p112
      %p114 = scmp.le.s32.totalorder 1, %s12
      %p115 = scmp.lt.s32.totalorder %s12, 3
      %p116 = pnand %p114, %p115
      %p117 = pneg %p116
      // Predicated region
      $region9: #{tpu_custom_call.1} parent=5 // pred_check
        _
      $region10: #{tpu_custom_call.1} parent=5 // pred_check_branch
        %119 = sbr.rel (%p116) target = $region12
      $region11: #{tpu_custom_call.1} parent=5 // pred_region
        %s120 = ssub.s32 %s12, 1
        // Predicated region
        $region13: #{tpu_custom_call.1} parent=11 // pred_check
          %p121 = pneg %p59
        $region14: #{tpu_custom_call.1} parent=11 // pred_check_branch
          %123 = sbr.rel (%p121) target = $region16
        $region15: #{tpu_custom_call.1} parent=11 // pred_region
          _
        $region16: #{tpu_custom_call.1} parent=11 // pred_fallthru
          _
        // Predicated region
        $region17: #{tpu_custom_call.1} parent=11 // pred_check
          %p124 = pneg %p80
        $region18: #{tpu_custom_call.1} parent=11 // pred_check_branch
          %126 = sbr.rel (%p124) target = $region20
        $region19: #{tpu_custom_call.1} parent=11 // pred_region
          _
        $region20: #{tpu_custom_call.1} parent=11 // pred_fallthru
          _
      $region12: #{tpu_custom_call.1} parent=5 // pred_fallthru
        _
      %p127 = scmp.lt.s32.totalorder %s12, 2
      // Predicated region
      $region21: #{tpu_custom_call.1} parent=5 // pred_check
        %p128 = pneg %p127
      $region22: #{tpu_custom_call.1} parent=5 // pred_check_branch
        %130 = sbr.rel (%p128) target = $region24
      $region23: #{tpu_custom_call.1} parent=5 // pred_region
        // Predicated region
        $region25: #{tpu_custom_call.1} parent=23 // pred_check
          %p131 = pneg %p32
        $region26: #{tpu_custom_call.1} parent=23 // pred_check_branch
          %133 = sbr.rel (%p131) target = $region28
        $region27: #{tpu_custom_call.1} parent=23 // pred_region
          %p134 = scmp.lt.s32.totalorder %s12, 1
          %s135 = scalar_select %p134, %s12, 1
          %s136 = smul.addr %s135, 8
          %s137 = scalar_lea.vmem %s0, %s136
        $region28: #{tpu_custom_call.1} parent=23 // pred_fallthru
          _
      $region24: #{tpu_custom_call.1} parent=5 // pred_fallthru
        _
      %p138 = scmp.le.s32.totalorder 1, %s12
      %p139 = scmp.lt.s32.totalorder %s12, 3
      %p140 = pnand %p138, %p139
      %p141 = pneg %p140
      // Predicated region
      $region29: #{tpu_custom_call.1} parent=5 // pred_check
        _
      $region30: #{tpu_custom_call.1} parent=5 // pred_check_branch
        %143 = sbr.rel (%p140) target = $region32
      $region31: #{tpu_custom_call.1} parent=5 // pred_region
        %s144 = ssub.s32 %s12, 1
        %p145 = scmp.lt.s32.totalorder %s17, 1
        %s146 = scalar_select %p145, %s17, 1
        %s147 = smul.addr %s146, 8
        %s148 = scalar_lea.vmem %s0, %s147
        %p149 = pneg %p38
        %p150 = pneg %p35
        %p151 = pneg %p59
        %p152 = pneg %p56
        %p153 = pneg %p80
        %p154 = pneg %p77
        %p155 = pneg %p106
        %p156 = pneg %p103
        %s157 = sand.u32 %s93, 1
        %s158 = scalar_lea.sflag [#allocation3], %s157
        %s159 = sand.u32 %s93, 1
        %s160 = smul.addr %s159, 8
        %s161 = scalar_lea.vmem [#allocation2], %s160
        %p162 = scmp.lt.s32.totalorder %s17, 1
        %s163 = scalar_select %p162, %s17, 1
        %s164 = smul.addr %s163, 8
        %s165 = scalar_lea.vmem %s0, %s164
        %v166 = vld [vmem:[%s165] sm:$0xff]
        %v167 = vld [vmem:[%s1] sm:$0xff]
        %v168 = vld [vmem:[%s1 + $0x8] sm:$0xff]
        %v169 = vld [vmem:[%s1 + $0x10] sm:$0xff]
        %v170 = vld [vmem:[%s1 + $0x18] sm:$0xff]
        %v171 = vld [vmem:[%s2] sm:$0x1]
        %v173 = vlaneseq
        %v174 = vshrl.u32 %v173, 7
        %v175 = vsub.s32 0, %v174
        %v176 = vrot.slane %v171, %v175
        %vm178 = vcmask 261120
        %v180 = vsel %vm178, %v166, 0
        %182 = vmatprep.subr.mxu0 0.0
        %183 = vmatpush1.msra.mxu0 0.0
        %184 = vmatprep.subr.mxu0 0.0
        %185 = vmatpush1.msra.mxu0 0.0
        %186 = vmatprep.subr.mxu0 0.0
        %187 = vmatpush1.msra.mxu0 0.0
        %188 = vmatprep.subr.mxu0 0.0
        %189 = vmatpush1.msra.mxu0 0.0
        %190 = vmatprep.subr.mxu0 0.0
        %191 = vmatpush1.msra.mxu0 0.0
        %192 = vmatprep.subr.mxu0 0.0
        %193 = vmatpush1.msra.mxu0 0.0
        %194 = vmatprep.subr.mxu0 0.0
        %195 = vmatpush1.msra.mxu0 0.0
        %196 = vmatprep.subr.mxu0 0.0
        %197 = vmatpush1.msra.mxu0 0.0
        %198 = vmatprep.subr.mxu0 0.0
        %199 = vmatpush1.msra.mxu0 0.0
        %200 = vmatprep.subr.mxu0 0.0
        %201 = vmatpush1.msra.mxu0 0.0
        %202 = vmatprep.subr.mxu0 0.0
        %203 = vmatpush1.msra.mxu0 0.0
        %204 = vmatprep.subr.mxu0 0.0
        %205 = vmatpush1.msra.mxu0 0.0
        %206 = vmatprep.subr.mxu0 0.0
        %207 = vmatpush1.msra.mxu0 %v170
        %208 = vmatprep.subr.mxu0 0.0
        %209 = vmatpush1.msra.mxu0 %v169
        %210 = vmatprep.subr.mxu0 0.0
        %211 = vmatpush1.msra.mxu0 %v168
        %212 = vmatprep.subr.mxu0 0.0
        %213 = vmatpush1.msra.mxu0 %v167
        %214 = vmatprep.subr.mxu0 0.0
        %215 = vmatpush2.msra.mxu0 0.0
        %216 = vmatprep.subr.mxu0 0.0
        %217 = vmatpush2.msra.mxu0 0.0
        %218 = vmatprep.subr.mxu0 0.0
        %219 = vmatpush2.msra.mxu0 0.0
        %220 = vmatprep.subr.mxu0 0.0
        %221 = vmatpush2.msra.mxu0 0.0
        %222 = vmatprep.subr.mxu0 0.0
        %223 = vmatpush2.msra.mxu0 0.0
        %224 = vmatprep.subr.mxu0 0.0
        %225 = vmatpush2.msra.mxu0 0.0
        %226 = vmatprep.subr.mxu0 0.0
        %227 = vmatpush2.msra.mxu0 0.0
        %228 = vmatprep.subr.mxu0 0.0
        %229 = vmatpush2.msra.mxu0 0.0
        %230 = vmatprep.subr.mxu0 0.0
        %231 = vmatpush2.msra.mxu0 0.0
        %232 = vmatprep.subr.mxu0 0.0
        %233 = vmatpush2.msra.mxu0 0.0
        %234 = vmatprep.subr.mxu0 0.0
        %235 = vmatpush2.msra.mxu0 0.0
        %236 = vmatprep.subr.mxu0 0.0
        %237 = vmatpush2.msra.mxu0 0.0
        %238 = vmatprep.subr.mxu0 0.0
        %239 = vmatpush2.msra.mxu0 0.0
        %240 = vmatprep.subr.mxu0 0.0
        %241 = vmatpush2.msra.mxu0 0.0
        %242 = vmatprep.subr.mxu0 0.0
        %243 = vmatpush2.msra.mxu0 0.0
        %244 = vmatprep.subr.mxu0 0.0
        %245 = vmatpush2.msra.mxu0 0.0
        %246 = vmatprep.mubr.f32.mxu0 0.0
        %247 = vmatmul.mubr.f32.gmra.mxu0 %v180
        %v248 = vpop.f32.mrf.mxu0
        %v249 = vadd.f32 %v176, %v248
        %v250 = vpop.f32.mrf.mxu0
        %251 = vdwg.mxu0
        %v252 = vxor.u32 %v249, 2147483648
        %v253 = vmul.f32 %v252, 1.442695
        %v254 = vpow.pop %v253
        %v255 = vadd.f32 %v254, 1.0
        %v256 = vrcp.pop %v255
        %v257 = vmul.f32 1.0, %v256
        %vm258 = vcmp.gt.f32.partialorder %v257, 0.5
        %v259 = vsel %vm258, 1, 0
        %v260 = vcvt.s32.f32 %v259
        %262 = vrot.lane.b32.xlu0 %v257, 16
        %v263 = vpop.permute.xlu0 %262
        %266 = vrot.lane.b32.xlu0 %v260, 32
        %v267 = vpop.permute.xlu0 %266
        %vm269 = vcmask 130048
        %v270 = vsel %vm269, %v249, %v263
        %v271 = vsel %vm178, %v270, %v267
        %vm272 = vcmask 392192
        %273 = vst.msk [vmem:[%s161] sm:$0xff] %vm272, %v271
        %s274 = sand.u32 %s93, 1
        %s275 = scalar_lea.sflag [#allocation3], %s274
        %s276 = sand.u32 %s93, 1
        %s277 = smul.addr %s276, 8
        %s278 = scalar_lea.vmem [#allocation2], %s277
        // Predicated region
        $region33: #{tpu_custom_call.1} parent=31 // pred_check
          %p279 = pneg %p103
        $region34: #{tpu_custom_call.1} parent=31 // pred_check_branch
          %281 = sbr.rel (%p279) target = $region36
        $region35: #{tpu_custom_call.1} parent=31 // pred_region
          %s283 = ssub.s32 128, 128
          %284 = vsyncadd %s275, %s283
          %s285 = smul.addr %s17, 128
          %s286 = scalar_lea.hbm %s3, %s285
          %s288 = sshll.u32 %s278, 4
          %s289 = int_to_ptr.vmem [resolvable:$true] %s288
          %291 = dma.vmem_to_hbm [thread:$0]  %s289, 128, %s286, %s275
        $region36: #{tpu_custom_call.1} parent=31 // pred_fallthru
          _
      $region32: #{tpu_custom_call.1} parent=5 // pred_fallthru
        _
      %p292 = scmp.le.s32.totalorder 2, %s12
      // Predicated region
      $region37: #{tpu_custom_call.1} parent=5 // pred_check
        %p293 = pneg %p292
      $region38: #{tpu_custom_call.1} parent=5 // pred_check_branch
        %295 = sbr.rel (%p293) target = $region40
      $region39: #{tpu_custom_call.1} parent=5 // pred_region
        %s296 = ssub.s32 %s12, 2
        // Predicated region
        $region41: #{tpu_custom_call.1} parent=39 // pred_check
          %p297 = pneg %p109
        $region42: #{tpu_custom_call.1} parent=39 // pred_check_branch
          %299 = sbr.rel (%p297) target = $region44
        $region43: #{tpu_custom_call.1} parent=39 // pred_region
          %s300 = sand.u32 %s94, 1
          %s301 = scalar_lea.sflag [#allocation3], %s300
          %s302 = sand.u32 %s94, 1
          %s303 = smul.addr %s302, 8
          %s304 = scalar_lea.vmem [#allocation2], %s303
          %305 = dma.done %s301, 128
        $region44: #{tpu_custom_call.1} parent=39 // pred_fallthru
          _
      $region40: #{tpu_custom_call.1} parent=5 // pred_fallthru
        _
    $region6: #{tpu_custom_call.1} parent=1 // loop_footer
      %s16 = sadd.s32 1, %s12
    $region7: #{tpu_custom_call.1} parent=1 // loop_footer_branch
      %11 = sbr.rel target = $region3
    $region8: #{tpu_custom_call.1} parent=1 // loop_exit
      _
    %306 = vsyncpa [#allocation3], 1
    %s307 = scalar_lea.sflag [#allocation3], 1
    %308 = vsyncpa %s307, 1

</llo_original>
